<compile_context>
chip_gen: v6e
topology: v6e:2x2x1
jax: 0.10.0
libtpu: 0.0.40
codegen_flags: <defaults>
</compile_context>

<pallas_src>
import functools
import math

import numpy as np

import jax
import jax.numpy as jnp
from jax.experimental import pallas as pl
from jax.experimental.pallas import tpu as pltpu


# ----------------------------------------------------------------------------
# Helpers
# ----------------------------------------------------------------------------
def _round_up(x: int, m: int) -> int:
    return (x + m - 1) // m * m


def _itemsize(dt) -> int:
    return np.dtype(dt).itemsize


def _vmem_capacity_bytes() -> int:
    """Per-TensorCore VMEM capacity; conservative 64 MiB (v7x) fallback."""
    try:
        info = pltpu.get_tpu_info()
        cap = int(getattr(info, "vmem_capacity_bytes", 0) or 0)
        if cap > 0:
            return cap
    except Exception:  # best-effort hardware query
        pass
    return 64 * 1024 * 1024


def _choose_tm(n_tokens: int, d_in_pad: int, d_out_pad: int) -> int:
    """Token-tile size. 16-row granularity covers bf16 (16,128) sublane tiling."""
    # Measured on v6e: 1024-row tiles ~86% of HBM roofline when feature widths
    # are small; 512 otherwise.
    target = 1024 if max(d_in_pad, d_out_pad) <= 1024 else 512
    tm = min(target, _round_up(max(n_tokens, 1), 16))
    # Prefer >= 2 grid steps so both TensorCores (v7x) / megacore halves get
    # work when there are enough tokens.
    if n_tokens >= 32 and pl.cdiv(n_tokens, tm) < 2:
        tm = _round_up(pl.cdiv(n_tokens, 2), 16)
    return tm


def _pick_feature_tile(d_pad: int, target: int = 512) -> int:
    """Largest multiple of 128 <= target that divides d_pad (d_pad % 128 == 0)."""
    t = min(target, d_pad)
    while d_pad % t:
        t -= 128
    return t


# ----------------------------------------------------------------------------
# Parameter packing (call ONCE at init — it is an HBM pass over the weights)
# ----------------------------------------------------------------------------
def pack_mlp_params(params, compute_dtype=jnp.bfloat16):
    """params: list of (w, b) with w: (d_in, d_out) [transpose of torch layout].

    Returns a list of (w_pad, b_pad) per layer:
      w_pad: (round_up(d_in,128), round_up(d_out,128)) in compute_dtype
      b_pad: (1, round_up(d_out,128)) float32
    Zero padding invariant: padded weight rows/cols and padded bias lanes are
    exactly 0, so padded lanes stay 0 through matmul + bias + ReLU and the
    layers compose without masking.
    """
    packed = []
    for w, b in params:
        d_in, d_out = w.shape
        d_in_pad = _round_up(d_in, 128)
        d_out_pad = _round_up(d_out, 128)
        w_pad = jnp.zeros((d_in_pad, d_out_pad), compute_dtype)
        w_pad = w_pad.at[:d_in, :d_out].set(w.astype(compute_dtype))
        b_pad = jnp.zeros((1, d_out_pad), jnp.float32)
        b_pad = b_pad.at[0, :d_out].set(b.astype(jnp.float32))
        packed.append((w_pad, b_pad))
    return packed


# ----------------------------------------------------------------------------
# Fused kernel: one token tile, all layers (weights VMEM-resident, untiled)
# ----------------------------------------------------------------------------
def _fused_mlp_kernel(*refs, num_layers: int):
    """refs = (x_ref, w0, b0, ..., w{L-1}, b{L-1}, o_ref).

    x_ref: (TM, d0_pad) bf16 token tile (pipelined along the grid).
    w_l / b_l: whole padded layer params, single-copy resident in VMEM.
    o_ref: (TM, dL_pad) out_dtype tile.
    Layer loop is unrolled (L is small & static); intermediate activations
    stay in VMEM/vregs — no HBM round-trips between layers.
    """
    x_ref, o_ref = refs[0], refs[-1]
    wb = refs[1:-1]
    h = x_ref[...]                                   # (TM, d0_pad) bf16
    y = None
    for l in range(num_layers):
        w = wb[2 * l][...]                           # (d_in_pad, d_out_pad) bf16
        b = wb[2 * l + 1][...]                       # (1, d_out_pad) f32
        y = jnp.dot(h, w, preferred_element_type=jnp.float32) + b   # MXU, f32 acc
        if l < num_layers - 1:
            h = jnp.maximum(y, 0.0).astype(x_ref.dtype)              # ReLU -> bf16
    o_ref[...] = y.astype(o_ref.dtype)


# ----------------------------------------------------------------------------
# Fallback kernel: one layer, K-tiled reduction (for weights too big for VMEM)
# ----------------------------------------------------------------------------
def _layer_matmul_kernel(x_ref, w_ref, b_ref, o_ref, acc_ref, *, apply_relu: bool):
    k = pl.program_id(2)

    @pl.when(k == 0)
    def _():
        acc_ref[...] = jnp.zeros_like(acc_ref)

    acc_ref[...] += jnp.dot(x_ref[...], w_ref[...],
                            preferred_element_type=jnp.float32)

    @pl.when(k == pl.num_programs(2) - 1)
    def _():
        y = acc_ref[...] + b_ref[...]
        if apply_relu:
            y = jnp.maximum(y, 0.0)
        o_ref[...] = y.astype(o_ref.dtype)


def _layer_forward(x_pad, w_pad, b_pad, *, apply_relu, out_dtype, tm):
    n_rows, d_in_pad = x_pad.shape
    d_out_pad = w_pad.shape[1]
    tk = _pick_feature_tile(d_in_pad)    # must divide K exactly (no garbage acc)
    tn = _pick_feature_tile(d_out_pad)
    grid = (pl.cdiv(n_rows, tm), d_out_pad // tn, d_in_pad // tk)

    cap = _vmem_capacity_bytes()
    vmem_need = (2 * tm * tk * _itemsize(x_pad.dtype)
                 + 2 * tk * tn * _itemsize(w_pad.dtype)
                 + 2 * tm * tn * _itemsize(out_dtype)
                 + tm * tn * 4 + 2 * tn * 4)
    vmem_limit = max(32 << 20, min(int(vmem_need * 1.5) + (8 << 20), cap - (4 << 20)))

    kernel = functools.partial(_layer_matmul_kernel, apply_relu=apply_relu)
    return pl.pallas_call(
        kernel,
        out_shape=jax.ShapeDtypeStruct((n_rows, d_out_pad), out_dtype),
        grid=grid,
        in_specs=[
            pl.BlockSpec((tm, tk), lambda i, j, k: (i, k)),
            pl.BlockSpec((tk, tn), lambda i, j, k: (k, j)),
            pl.BlockSpec((1, tn), lambda i, j, k: (0, j)),
        ],
        out_specs=pl.BlockSpec((tm, tn), lambda i, j, k: (i, j)),
        scratch_shapes=[pltpu.VMEM((tm, tn), jnp.float32)],
        compiler_params=pltpu.CompilerParams(
            dimension_semantics=("parallel", "parallel", "arbitrary"),
            vmem_limit_bytes=vmem_limit,
        ),
    )(x_pad, w_pad, b_pad)


# ----------------------------------------------------------------------------
# Forward pass
# ----------------------------------------------------------------------------
def mlp_forward(packed_params, x, *, d_out=None, out_dtype=None,
                compute_dtype=jnp.bfloat16, force_unfused=False):
    """Apply the packed MLP over the last axis of x (arbitrary leading shape).

    packed_params: output of pack_mlp_params() (pack once at init, not per call).
    d_out: true (unpadded) output width; if None, the padded width is returned.
    out_dtype: defaults to compute_dtype (bf16) — the result is computed from
      bf16 MXU operands anyway, and the narrow bf16 store halves HBM writeback.
    """
    if out_dtype is None:
        out_dtype = compute_dtype
    num_layers = len(packed_params)
    lead_shape = x.shape[:-1]
    d_in = x.shape[-1]
    d_in_pad = packed_params[0][0].shape[0]
    d_out_pad = packed_params[-1][0].shape[1]

    n = math.prod(lead_shape) if lead_shape else 1
    tm = _choose_tm(n, d_in_pad, d_out_pad)
    # Only tiny inputs (less than one tile) get an explicit token pad; otherwise
    # the partial last block is handled by Pallas masking (rows are independent).
    n_rows = tm if n < tm else n

    x_flat = x.reshape(n, d_in).astype(compute_dtype)
    pad_rows, pad_cols = n_rows - n, d_in_pad - d_in
    if pad_rows or pad_cols:
        x_flat = jnp.pad(x_flat, ((0, pad_rows), (0, pad_cols)))

    flat_wb = [a for pair in packed_params for a in pair]
    w_bytes = sum(int(a.size) * _itemsize(a.dtype) for a in flat_wb)
    io_tile_bytes = (2 * tm * d_in_pad * _itemsize(compute_dtype)
                     + 2 * tm * d_out_pad * _itemsize(out_dtype))
    cap = _vmem_capacity_bytes()
    resident_bytes = w_bytes + io_tile_bytes
    use_fused = (not force_unfused) and resident_bytes <= int(0.7 * cap)

    if use_fused:
        grid = (pl.cdiv(n_rows, tm),)
        vmem_limit = max(32 << 20,
                         min(int(resident_bytes * 1.25) + (8 << 20), cap - (4 << 20)))
        flops = 2 * n_rows * sum(int(w.shape[0]) * int(w.shape[1])
                                 for w, _ in packed_params)
        bytes_accessed = (int(x_flat.size) * _itemsize(x_flat.dtype) + w_bytes
                          + n_rows * d_out_pad * _itemsize(out_dtype))

        in_specs = [pl.BlockSpec((tm, d_in_pad), lambda i: (i, 0))]
        # Untiled VMEM residency: copied in once, single-buffered, never refetched.
        in_specs += [pl.BlockSpec(memory_space=pltpu.MemorySpace.VMEM)
                     for _ in flat_wb]

        out = pl.pallas_call(
            functools.partial(_fused_mlp_kernel, num_layers=num_layers),
            out_shape=jax.ShapeDtypeStruct((n_rows, d_out_pad), out_dtype),
            grid=grid,
            in_specs=in_specs,
            out_specs=pl.BlockSpec((tm, d_out_pad), lambda i: (i, 0)),
            compiler_params=pltpu.CompilerParams(
                dimension_semantics=("parallel",),
                vmem_limit_bytes=vmem_limit,
            ),
            cost_estimate=pl.CostEstimate(
                flops=flops, transcendentals=0, bytes_accessed=bytes_accessed),
        )(x_flat, *flat_wb)
    else:
        # Weights exceed the per-core VMEM budget (v7x hits this first):
        # per-layer K-tiled matmul kernels; activations round-trip HBM in bf16.
        h = x_flat
        for l, (w_pad, b_pad) in enumerate(packed_params):
            last = (l == num_layers - 1)
            h = _layer_forward(h, w_pad, b_pad, apply_relu=not last,
                               out_dtype=out_dtype if last else compute_dtype,
                               tm=tm)
        out = h

    d_out_true = d_out if d_out is not None else d_out_pad
    out = out[:n, :d_out_true]
    return out.reshape(*lead_shape, d_out_true)


# ----------------------------------------------------------------------------
# Init (matches nn.Linear default: U(-1/sqrt(fan_in), 1/sqrt(fan_in)))
# ----------------------------------------------------------------------------
def init_mlp_params(key, input_dim, hidden_dim, output_dim, num_layers):
    h = [hidden_dim] * (num_layers - 1)
    dims = list(zip([input_dim] + h, h + [output_dim]))
    params = []
    for (n_in, n_out) in dims:
        key, kw, kb = jax.random.split(key, 3)
        bound = 1.0 / (n_in ** 0.5)
        # stored transposed relative to PyTorch: (in, out)
        w = jax.random.uniform(kw, (n_in, n_out), jnp.float32, -bound, bound)
        b = jax.random.uniform(kb, (n_out,), jnp.float32, -bound, bound)
        params.append((w, b))
    return params


def mlp_reference(params, x):
    """Pure-JAX f32 reference for correctness checking."""
    num_layers = len(params)
    h = x
    for i, (w, b) in enumerate(params):
        h = jnp.dot(h, w) + b
        if i < num_layers - 1:
            h = jnp.maximum(h, 0.0)
    return h


if __name__ == "__main__":
    key = jax.random.PRNGKey(0)
    k_x, k_p = jax.random.split(key)

    # Small shapes consistent with the module: batch=2, seq=8, input_dim=16,
    # hidden_dim=32, output_dim=8, num_layers=3.
    input_dim, hidden_dim, output_dim, num_layers = 16, 32, 8, 3
    x = jax.random.normal(k_x, (2, 8, input_dim), jnp.float32)

    params = init_mlp_params(k_p, input_dim, hidden_dim, output_dim, num_layers)
    packed = pack_mlp_params(params)   # one-time packing, hoisted out of forward

    ref = mlp_reference(params, x)

    # Fused path: whole MLP in one pallas_call, weights VMEM-resident.
    fwd = jax.jit(functools.partial(mlp_forward, d_out=output_dim))
    out = jax.block_until_ready(fwd(packed, x))
    assert out.shape == (2, 8, output_dim), out.shape
    # bf16 matmul operands (f32 accumulation) + bf16 output -> relaxed tolerance.
    assert jnp.allclose(out.astype(jnp.float32), ref, atol=4e-2, rtol=4e-2), \
        "fused kernel mismatch vs reference"

    # Per-layer K-tiled fallback (used when weights exceed the VMEM budget);
    # exercised here explicitly to validate the path.
    fwd_kt = jax.jit(functools.partial(mlp_forward, d_out=output_dim,
                                       force_unfused=True))
    out_kt = jax.block_until_ready(fwd_kt(packed, x))
    assert out_kt.shape == (2, 8, output_dim), out_kt.shape
    assert jnp.allclose(out_kt.astype(jnp.float32), ref, atol=4e-2, rtol=4e-2), \
        "fallback kernel mismatch vs reference"

    print("KERNEL_OK")
</pallas_src>

<mosaic_0001>
module attributes {stable_mosaic.version = 11 : i64} {
  func.func @_fused_mlp_kernel(%arg0: i32, %arg1: memref<16x128xbf16, #tpu.memory_space<vmem>>, %arg2: memref<128x128xbf16, #tpu.memory_space<vmem>>, %arg3: memref<1x128xf32, #tpu.memory_space<vmem>>, %arg4: memref<128x128xbf16, #tpu.memory_space<vmem>>, %arg5: memref<1x128xf32, #tpu.memory_space<vmem>>, %arg6: memref<128x128xbf16, #tpu.memory_space<vmem>>, %arg7: memref<1x128xf32, #tpu.memory_space<vmem>>, %arg8: memref<16x128xbf16, #tpu.memory_space<vmem>>) attributes {dimension_semantics = [#tpu.dimension_semantics<parallel>], iteration_bounds = array<i64: 1>, scalar_prefetch = 0 : i64, scratch_operands = 0 : i64, tpu.core_type = #tpu.core_type<tc>, window_params = [{transform_indices = @transform_0, window_bounds = array<i64: 16, 128>}, {pipeline_mode = #tpu.pipeline_mode<synchronous>, transform_indices = @transform_1, window_bounds = array<i64: 128, 128>}, {pipeline_mode = #tpu.pipeline_mode<synchronous>, transform_indices = @transform_2, window_bounds = array<i64: 1, 128>}, {pipeline_mode = #tpu.pipeline_mode<synchronous>, transform_indices = @transform_3, window_bounds = array<i64: 128, 128>}, {pipeline_mode = #tpu.pipeline_mode<synchronous>, transform_indices = @transform_4, window_bounds = array<i64: 1, 128>}, {pipeline_mode = #tpu.pipeline_mode<synchronous>, transform_indices = @transform_5, window_bounds = array<i64: 128, 128>}, {pipeline_mode = #tpu.pipeline_mode<synchronous>, transform_indices = @transform_6, window_bounds = array<i64: 1, 128>}, {transform_indices = @transform_7, window_bounds = array<i64: 16, 128>}]} {
    %c0 = arith.constant 0 : index
    %c0_0 = arith.constant 0 : index
    %0 = vector.load %arg1[%c0, %c0_0] : memref<16x128xbf16, #tpu.memory_space<vmem>>, vector<16x128xbf16>
    %c0_1 = arith.constant 0 : index
    %c0_2 = arith.constant 0 : index
    %1 = vector.load %arg2[%c0_1, %c0_2] : memref<128x128xbf16, #tpu.memory_space<vmem>>, vector<128x128xbf16>
    %c0_3 = arith.constant 0 : index
    %c0_4 = arith.constant 0 : index
    %2 = vector.load %arg3[%c0_3, %c0_4] : memref<1x128xf32, #tpu.memory_space<vmem>>, vector<1x128xf32>
    %cst = arith.constant dense<0.000000e+00> : vector<16x128xf32>
    %3 = tpu.matmul %0, %1, %cst {dimension_numbers = #tpu.dot_dimension_numbers<[1], [0], [0], [1], [0, 0, 1, 1], [], []>} : vector<16x128xbf16>, vector<128x128xbf16>, vector<16x128xf32> -> vector<16x128xf32>
    %4 = vector.broadcast %2 : vector<1x128xf32> to vector<16x128xf32>
    %5 = arith.addf %3, %4 : vector<16x128xf32>
    %cst_5 = arith.constant 0.000000e+00 : f32
    %6 = vector.broadcast %cst_5 : f32 to vector<16x128xf32>
    %7 = arith.maximumf %5, %6 : vector<16x128xf32>
    %8 = arith.truncf %7 : vector<16x128xf32> to vector<16x128xbf16>
    %c0_6 = arith.constant 0 : index
    %c0_7 = arith.constant 0 : index
    %9 = vector.load %arg4[%c0_6, %c0_7] : memref<128x128xbf16, #tpu.memory_space<vmem>>, vector<128x128xbf16>
    %c0_8 = arith.constant 0 : index
    %c0_9 = arith.constant 0 : index
    %10 = vector.load %arg5[%c0_8, %c0_9] : memref<1x128xf32, #tpu.memory_space<vmem>>, vector<1x128xf32>
    %cst_10 = arith.constant dense<0.000000e+00> : vector<16x128xf32>
    %11 = tpu.matmul %8, %9, %cst_10 {dimension_numbers = #tpu.dot_dimension_numbers<[1], [0], [0], [1], [0, 0, 1, 1], [], []>} : vector<16x128xbf16>, vector<128x128xbf16>, vector<16x128xf32> -> vector<16x128xf32>
    %12 = vector.broadcast %10 : vector<1x128xf32> to vector<16x128xf32>
    %13 = arith.addf %11, %12 : vector<16x128xf32>
    %cst_11 = arith.constant 0.000000e+00 : f32
    %14 = vector.broadcast %cst_11 : f32 to vector<16x128xf32>
    %15 = arith.maximumf %13, %14 : vector<16x128xf32>
    %16 = arith.truncf %15 : vector<16x128xf32> to vector<16x128xbf16>
    %c0_12 = arith.constant 0 : index
    %c0_13 = arith.constant 0 : index
    %17 = vector.load %arg6[%c0_12, %c0_13] : memref<128x128xbf16, #tpu.memory_space<vmem>>, vector<128x128xbf16>
    %c0_14 = arith.constant 0 : index
    %c0_15 = arith.constant 0 : index
    %18 = vector.load %arg7[%c0_14, %c0_15] : memref<1x128xf32, #tpu.memory_space<vmem>>, vector<1x128xf32>
    %cst_16 = arith.constant dense<0.000000e+00> : vector<16x128xf32>
    %19 = tpu.matmul %16, %17, %cst_16 {dimension_numbers = #tpu.dot_dimension_numbers<[1], [0], [0], [1], [0, 0, 1, 1], [], []>} : vector<16x128xbf16>, vector<128x128xbf16>, vector<16x128xf32> -> vector<16x128xf32>
    %20 = vector.broadcast %18 : vector<1x128xf32> to vector<16x128xf32>
    %21 = arith.addf %19, %20 : vector<16x128xf32>
    %22 = arith.truncf %21 : vector<16x128xf32> to vector<16x128xbf16>
    %c0_17 = arith.constant 0 : index
    %c0_18 = arith.constant 0 : index
    %23 = vector.load %arg8[%c0_17, %c0_18] : memref<16x128xbf16, #tpu.memory_space<vmem>>, vector<16x128xbf16>
    tpu.vector_store %arg8[%c0_17, %c0_18], %22 {strides = array<i32>} : memref<16x128xbf16, #tpu.memory_space<vmem>>, vector<16x128xbf16>,
    return
  }
  func.func @transform_0(%arg0: i32) -> (i32, i32) {
    %c0_i32 = arith.constant 0 : i32
    %c0_i32_0 = arith.constant 0 : i32
    return %arg0, %c0_i32 : i32, i32
  }
  func.func @transform_1(%arg0: i32) -> (i32, i32) {
    %c0_i32 = arith.constant 0 : i32
    %c0_i32_0 = arith.constant 0 : i32
    %c0_i32_1 = arith.constant 0 : i32
    return %c0_i32, %c0_i32_0 : i32, i32
  }
  func.func @transform_2(%arg0: i32) -> (i32, i32) {
    %c0_i32 = arith.constant 0 : i32
    %c0_i32_0 = arith.constant 0 : i32
    %c0_i32_1 = arith.constant 0 : i32
    return %c0_i32, %c0_i32_0 : i32, i32
  }
  func.func @transform_3(%arg0: i32) -> (i32, i32) {
    %c0_i32 = arith.constant 0 : i32
    %c0_i32_0 = arith.constant 0 : i32
    %c0_i32_1 = arith.constant 0 : i32
    return %c0_i32, %c0_i32_0 : i32, i32
  }
  func.func @transform_4(%arg0: i32) -> (i32, i32) {
    %c0_i32 = arith.constant 0 : i32
    %c0_i32_0 = arith.constant 0 : i32
    %c0_i32_1 = arith.constant 0 : i32
    return %c0_i32, %c0_i32_0 : i32, i32
  }
  func.func @transform_5(%arg0: i32) -> (i32, i32) {
    %c0_i32 = arith.constant 0 : i32
    %c0_i32_0 = arith.constant 0 : i32
    %c0_i32_1 = arith.constant 0 : i32
    return %c0_i32, %c0_i32_0 : i32, i32
  }
  func.func @transform_6(%arg0: i32) -> (i32, i32) {
    %c0_i32 = arith.constant 0 : i32
    %c0_i32_0 = arith.constant 0 : i32
    %c0_i32_1 = arith.constant 0 : i32
    return %c0_i32, %c0_i32_0 : i32, i32
  }
  func.func @transform_7(%arg0: i32) -> (i32, i32) {
    %c0_i32 = arith.constant 0 : i32
    %c0_i32_0 = arith.constant 0 : i32
    return %arg0, %c0_i32 : i32, i32
  }
}

</mosaic_0001>

<llo_original>
// kernel: mlp_forward.1
$region0: #{mlp_forward.1}
  #allocation0 [shape = 'u32[]', space=smem, size = 0x4, offset = 0x4, fixed_abs, tag = 'smem constant byte address 0x4 - core index']
  #allocation1 [shape = 'u32[144,128]{1,0:T(1,128)}', space=vmem, size = 0x12000, scoped, tag = 'internal scratch']
  %s0 = inlined_call_operand.vmem [shape: bf16[16,128], index: 0, kind: input, shape index: {}]
  %s1 = inlined_call_operand.hbm [shape: bf16[128,128], index: 1, kind: input, shape index: {}]
  %s2 = inlined_call_operand.vmem [shape: f32[1,128], index: 2, kind: input, shape index: {}]
  %s3 = inlined_call_operand.hbm [shape: bf16[128,128], index: 3, kind: input, shape index: {}]
  %s4 = inlined_call_operand.vmem [shape: f32[1,128], index: 4, kind: input, shape index: {}]
  %s5 = inlined_call_operand.hbm [shape: bf16[128,128], index: 5, kind: input, shape index: {}]
  %s6 = inlined_call_operand.vmem [shape: f32[1,128], index: 6, kind: input, shape index: {}]
  %s7 = inlined_call_operand.vmem [shape: bf16[16,128], index: 7, kind: output, shape index: {}]
  %s8 = sld [smem:[#allocation0]]
  $region50: #{mlp_forward.1} parent=0
    _
  %s10 = ssub.s32 1, %s8
  %s11 = scalar_select 0, %s10, %s8
  $region1: #{mlp_forward.1} parent=0
    #allocation2 [shape = 'u8[32768]{0}', space=vmem, size = 0x8000, scoped, tag = 'input window, operand 1, single buffered']
    #allocation3 [shape = 's32[1]{0}', space=sflag, size = 0x4, scoped, tag = 'scoped memory for mlp_forward.1']
    #allocation4 [shape = 'u8[32768]{0}', space=vmem, size = 0x8000, scoped, tag = 'input window, operand 3, single buffered']
    #allocation5 [shape = 's32[1]{0}', space=sflag, size = 0x4, scoped, tag = 'scoped memory for mlp_forward.1']
    #allocation6 [shape = 'u8[32768]{0}', space=vmem, size = 0x8000, scoped, tag = 'input window, operand 5, single buffered']
    %12 = vsyncpa [#allocation3], 0
    %13 = vsyncpa [#allocation5], 0
    // Predicated region
    $region2: #{mlp_forward.1} parent=1 // pred_check
      _
    $region3: #{mlp_forward.1} parent=1 // pred_check_branch
      %15 = sbr.rel (0) target = $region5
    $region4: #{mlp_forward.1} parent=1 // pred_region
      _
    $region5: #{mlp_forward.1} parent=1 // pred_fallthru
      _
    // Predicated region
    $region6: #{mlp_forward.1} parent=1 // pred_check
      _
    $region7: #{mlp_forward.1} parent=1 // pred_check_branch
      %17 = sbr.rel (0) target = $region9
    $region8: #{mlp_forward.1} parent=1 // pred_region
      %s19 = ssub.s32 1024, 1024
      %20 = vsyncadd [#allocation3], %s19
      %s21 = sshll.u32 [#allocation2], 4
      %s22 = int_to_ptr.vmem [resolvable:$true] %s21
      %27 = dma.hbm_to_vmem [thread:$0]  %s1, 1024, %s22, [#allocation3], 64, 64, 4
    $region9: #{mlp_forward.1} parent=1 // pred_fallthru
      _
    // Predicated region
    $region10: #{mlp_forward.1} parent=1 // pred_check
      _
    $region11: #{mlp_forward.1} parent=1 // pred_check_branch
      %29 = sbr.rel (0) target = $region13
    $region12: #{mlp_forward.1} parent=1 // pred_region
      _
    $region13: #{mlp_forward.1} parent=1 // pred_fallthru
      _
    // Predicated region
    $region14: #{mlp_forward.1} parent=1 // pred_check
      _
    $region15: #{mlp_forward.1} parent=1 // pred_check_branch
      %31 = sbr.rel (0) target = $region17
    $region16: #{mlp_forward.1} parent=1 // pred_region
      %s33 = ssub.s32 1024, 1024
      %34 = vsyncadd [#allocation5], %s33
      %s35 = sshll.u32 [#allocation4], 4
      %s36 = int_to_ptr.vmem [resolvable:$true] %s35
      %41 = dma.hbm_to_vmem [thread:$0]  %s3, 1024, %s36, [#allocation5], 64, 64, 4
    $region17: #{mlp_forward.1} parent=1 // pred_fallthru
      _
    // Predicated region
    $region18: #{mlp_forward.1} parent=1 // pred_check
      _
    $region19: #{mlp_forward.1} parent=1 // pred_check_branch
      %43 = sbr.rel (0) target = $region21
    $region20: #{mlp_forward.1} parent=1 // pred_region
      _
    $region21: #{mlp_forward.1} parent=1 // pred_fallthru
      _
    // Predicated region
    $region22: #{mlp_forward.1} parent=1 // pred_check
      _
    $region23: #{mlp_forward.1} parent=1 // pred_check_branch
      %45 = sbr.rel (0) target = $region25
    $region24: #{mlp_forward.1} parent=1 // pred_region
      %s47 = ssub.s32 1024, 1024
      %48 = vsyncadd [#allocation5], %s47
      %s49 = sshll.u32 [#allocation6], 4
      %s50 = int_to_ptr.vmem [resolvable:$true] %s49
      %55 = dma.hbm_to_vmem [thread:$0]  %s5, 1024, %s50, [#allocation5], 64, 64, 4
    $region25: #{mlp_forward.1} parent=1 // pred_fallthru
      _
    // Predicated region
    $region26: #{mlp_forward.1} parent=1 // pred_check
      _
    $region27: #{mlp_forward.1} parent=1 // pred_check_branch
      %57 = sbr.rel (0) target = $region29
    $region28: #{mlp_forward.1} parent=1 // pred_region
      _
    $region29: #{mlp_forward.1} parent=1 // pred_fallthru
      _
    // Predicated region
    $region30: #{mlp_forward.1} parent=1 // pred_check
      _
    $region31: #{mlp_forward.1} parent=1 // pred_check_branch
      %59 = sbr.rel (0) target = $region33
    $region32: #{mlp_forward.1} parent=1 // pred_region
      %60 = dma.done [#allocation3], 1024
    $region33: #{mlp_forward.1} parent=1 // pred_fallthru
      _
    // Predicated region
    $region34: #{mlp_forward.1} parent=1 // pred_check
      _
    $region35: #{mlp_forward.1} parent=1 // pred_check_branch
      %62 = sbr.rel (0) target = $region37
    $region36: #{mlp_forward.1} parent=1 // pred_region
      %63 = dma.done [#allocation5], 1024
    $region37: #{mlp_forward.1} parent=1 // pred_fallthru
      _
    // Predicated region
    $region38: #{mlp_forward.1} parent=1 // pred_check
      _
    $region39: #{mlp_forward.1} parent=1 // pred_check_branch
      %65 = sbr.rel (0) target = $region41
    $region40: #{mlp_forward.1} parent=1 // pred_region
      %66 = dma.done [#allocation5], 1024
    $region41: #{mlp_forward.1} parent=1 // pred_fallthru
      _
    %v68 = vld [vmem:[%s0] sm:$0xf]
    %v69 = vld [vmem:[%s0 + $0x4] sm:$0xf]
    %v70 = vld [vmem:[#allocation2] sm:$0xf]
    %v71 = vld [vmem:[#allocation2 + $0x4] sm:$0xf]
    %v72 = vld [vmem:[#allocation2 + $0x8] sm:$0xf]
    %v73 = vld [vmem:[#allocation2 + $0xc] sm:$0xf]
    %v74 = vld [vmem:[#allocation2 + $0x10] sm:$0xf]
    %v75 = vld [vmem:[#allocation2 + $0x14] sm:$0xf]
    %v76 = vld [vmem:[#allocation2 + $0x18] sm:$0xf]
    %v77 = vld [vmem:[#allocation2 + $0x1c] sm:$0xf]
    %v78 = vld [vmem:[#allocation2 + $0x20] sm:$0xf]
    %v79 = vld [vmem:[#allocation2 + $0x24] sm:$0xf]
    %v80 = vld [vmem:[#allocation2 + $0x28] sm:$0xf]
    %v81 = vld [vmem:[#allocation2 + $0x2c] sm:$0xf]
    %v82 = vld [vmem:[#allocation2 + $0x30] sm:$0xf]
    %v83 = vld [vmem:[#allocation2 + $0x34] sm:$0xf]
    %v84 = vld [vmem:[#allocation2 + $0x38] sm:$0xf]
    %v85 = vld [vmem:[#allocation2 + $0x3c] sm:$0xf]
    %v86 = vld [vmem:[%s2] sm:$0x1]
    %v88 = vlaneseq
    %v89 = vshrl.u32 %v88, 7
    %v90 = vsub.s32 0, %v89
    %v91 = vrot.slane %v86, %v90
    %v95 = vunpack.c.l.b16 %v68
    %v96 = vunpack.c.l.b16 %v69
    %v97 = vpack.c.b16 %v96, %v95
    %v115 = vunpack.c.l.b16 %v70
    %v116 = vunpack.c.l.b16 %v71
    %v117 = vunpack.c.l.b16 %v72
    %v118 = vunpack.c.l.b16 %v73
    %v119 = vunpack.c.l.b16 %v74
    %v120 = vunpack.c.l.b16 %v75
    %v121 = vunpack.c.l.b16 %v76
    %v122 = vunpack.c.l.b16 %v77
    %v123 = vunpack.c.l.b16 %v78
    %v124 = vunpack.c.l.b16 %v79
    %v125 = vunpack.c.l.b16 %v80
    %v126 = vunpack.c.l.b16 %v81
    %v127 = vunpack.c.l.b16 %v82
    %v128 = vunpack.c.l.b16 %v83
    %v129 = vunpack.c.l.b16 %v84
    %v130 = vunpack.c.l.b16 %v85
    %v131 = vpack.c.b16 %v116, %v115
    %v132 = vpack.c.b16 %v118, %v117
    %v133 = vpack.c.b16 %v120, %v119
    %v134 = vpack.c.b16 %v122, %v121
    %v135 = vpack.c.b16 %v124, %v123
    %v136 = vpack.c.b16 %v126, %v125
    %v137 = vpack.c.b16 %v128, %v127
    %v138 = vpack.c.b16 %v130, %v129
    %147 = vmatprep.subr.bf16.mxu0 0
    %148 = vmatpush1.bf16.msra.mxu0 %v138
    %149 = vmatprep.subr.bf16.mxu0 0
    %150 = vmatpush1.bf16.msra.mxu0 %v137
    %151 = vmatprep.subr.bf16.mxu0 0
    %152 = vmatpush1.bf16.msra.mxu0 %v136
    %153 = vmatprep.subr.bf16.mxu0 0
    %154 = vmatpush1.bf16.msra.mxu0 %v135
    %155 = vmatprep.subr.bf16.mxu0 0
    %156 = vmatpush1.bf16.msra.mxu0 %v134
    %157 = vmatprep.subr.bf16.mxu0 0
    %158 = vmatpush1.bf16.msra.mxu0 %v133
    %159 = vmatprep.subr.bf16.mxu0 0
    %160 = vmatpush1.bf16.msra.mxu0 %v132
    %161 = vmatprep.subr.bf16.mxu0 0
    %162 = vmatpush1.bf16.msra.mxu0 %v131
    %163 = vmatprep.subr.bf16.mxu0 0
    %164 = vmatpush2.bf16.msra.mxu0 0
    %165 = vmatprep.subr.bf16.mxu0 0
    %166 = vmatpush2.bf16.msra.mxu0 0
    %167 = vmatprep.subr.bf16.mxu0 0
    %168 = vmatpush2.bf16.msra.mxu0 0
    %169 = vmatprep.subr.bf16.mxu0 0
    %170 = vmatpush2.bf16.msra.mxu0 0
    %171 = vmatprep.subr.bf16.mxu0 0
    %172 = vmatpush2.bf16.msra.mxu0 0
    %173 = vmatprep.subr.bf16.mxu0 0
    %174 = vmatpush2.bf16.msra.mxu0 0
    %175 = vmatprep.subr.bf16.mxu0 0
    %176 = vmatpush2.bf16.msra.mxu0 0
    %177 = vmatprep.subr.bf16.mxu0 0
    %178 = vmatpush2.bf16.msra.mxu0 0
    %179 = vmatprep.mubr.bf16.mxu0 0
    %180 = vmatmul.mubr.bf16.gmra.mxu0 %v97
    %v181 = vpop.f32.mrf.mxu0
    %v182 = vadd.f32 %v91, %v181
    %v183 = vpop.f32.mrf.mxu0
    %v184 = vpop.f32.mrf.mxu0
    %v185 = vadd.f32 %v91, %v184
    %v186 = vpop.f32.mrf.mxu0
    %187 = vdwg.mxu0
    %v188 = vmax.f32 %v182, 0.0
    %v189 = vmax.f32 %v185, 0.0
    %v190 = vpack.c.bf16 %v189, %v188
    %v191 = vld [vmem:[#allocation4] sm:$0xf]
    %v192 = vld [vmem:[#allocation4 + $0x4] sm:$0xf]
    %v193 = vld [vmem:[#allocation4 + $0x8] sm:$0xf]
    %v194 = vld [vmem:[#allocation4 + $0xc] sm:$0xf]
    %v195 = vld [vmem:[#allocation4 + $0x10] sm:$0xf]
    %v196 = vld [vmem:[#allocation4 + $0x14] sm:$0xf]
    %v197 = vld [vmem:[#allocation4 + $0x18] sm:$0xf]
    %v198 = vld [vmem:[#allocation4 + $0x1c] sm:$0xf]
    %v199 = vld [vmem:[#allocation4 + $0x20] sm:$0xf]
    %v200 = vld [vmem:[#allocation4 + $0x24] sm:$0xf]
    %v201 = vld [vmem:[#allocation4 + $0x28] sm:$0xf]
    %v202 = vld [vmem:[#allocation4 + $0x2c] sm:$0xf]
    %v203 = vld [vmem:[#allocation4 + $0x30] sm:$0xf]
    %v204 = vld [vmem:[#allocation4 + $0x34] sm:$0xf]
    %v205 = vld [vmem:[#allocation4 + $0x38] sm:$0xf]
    %v206 = vld [vmem:[#allocation4 + $0x3c] sm:$0xf]
    %v207 = vld [vmem:[%s4] sm:$0x1]
    %v209 = vlaneseq
    %v210 = vshrl.u32 %v209, 7
    %v211 = vsub.s32 0, %v210
    %v212 = vrot.slane %v207, %v211
    %v230 = vunpack.c.l.b16 %v191
    %v231 = vunpack.c.l.b16 %v192
    %v232 = vunpack.c.l.b16 %v193
    %v233 = vunpack.c.l.b16 %v194
    %v234 = vunpack.c.l.b16 %v195
    %v235 = vunpack.c.l.b16 %v196
    %v236 = vunpack.c.l.b16 %v197
    %v237 = vunpack.c.l.b16 %v198
    %v238 = vunpack.c.l.b16 %v199
    %v239 = vunpack.c.l.b16 %v200
    %v240 = vunpack.c.l.b16 %v201
    %v241 = vunpack.c.l.b16 %v202
    %v242 = vunpack.c.l.b16 %v203
    %v243 = vunpack.c.l.b16 %v204
    %v244 = vunpack.c.l.b16 %v205
    %v245 = vunpack.c.l.b16 %v206
    %v246 = vpack.c.b16 %v231, %v230
    %v247 = vpack.c.b16 %v233, %v232
    %v248 = vpack.c.b16 %v235, %v234
    %v249 = vpack.c.b16 %v237, %v236
    %v250 = vpack.c.b16 %v239, %v238
    %v251 = vpack.c.b16 %v241, %v240
    %v252 = vpack.c.b16 %v243, %v242
    %v253 = vpack.c.b16 %v245, %v244
    %262 = vmatprep.subr.bf16.mxu0 0
    %263 = vmatpush1.bf16.msra.mxu0 %v253
    %264 = vmatprep.subr.bf16.mxu0 0
    %265 = vmatpush1.bf16.msra.mxu0 %v252
    %266 = vmatprep.subr.bf16.mxu0 0
    %267 = vmatpush1.bf16.msra.mxu0 %v251
    %268 = vmatprep.subr.bf16.mxu0 0
    %269 = vmatpush1.bf16.msra.mxu0 %v250
    %270 = vmatprep.subr.bf16.mxu0 0
    %271 = vmatpush1.bf16.msra.mxu0 %v249
    %272 = vmatprep.subr.bf16.mxu0 0
    %273 = vmatpush1.bf16.msra.mxu0 %v248
    %274 = vmatprep.subr.bf16.mxu0 0
    %275 = vmatpush1.bf16.msra.mxu0 %v247
    %276 = vmatprep.subr.bf16.mxu0 0
    %277 = vmatpush1.bf16.msra.mxu0 %v246
    %278 = vmatprep.subr.bf16.mxu0 0
    %279 = vmatpush2.bf16.msra.mxu0 0
    %280 = vmatprep.subr.bf16.mxu0 0
    %281 = vmatpush2.bf16.msra.mxu0 0
    %282 = vmatprep.subr.bf16.mxu0 0
    %283 = vmatpush2.bf16.msra.mxu0 0
    %284 = vmatprep.subr.bf16.mxu0 0
    %285 = vmatpush2.bf16.msra.mxu0 0
    %286 = vmatprep.subr.bf16.mxu0 0
    %287 = vmatpush2.bf16.msra.mxu0 0
    %288 = vmatprep.subr.bf16.mxu0 0
    %289 = vmatpush2.bf16.msra.mxu0 0
    %290 = vmatprep.subr.bf16.mxu0 0
    %291 = vmatpush2.bf16.msra.mxu0 0
    %292 = vmatprep.subr.bf16.mxu0 0
    %293 = vmatpush2.bf16.msra.mxu0 0
    %294 = vmatprep.mubr.bf16.mxu0 0
    %295 = vmatmul.mubr.bf16.gmra.mxu0 %v190
    %v296 = vpop.f32.mrf.mxu0
    %v297 = vadd.f32 %v212, %v296
    %v298 = vpop.f32.mrf.mxu0
    %v299 = vpop.f32.mrf.mxu0
    %v300 = vadd.f32 %v212, %v299
    %v301 = vpop.f32.mrf.mxu0
    %302 = vdwg.mxu0
    %v303 = vmax.f32 %v297, 0.0
    %v304 = vmax.f32 %v300, 0.0
    %v305 = vpack.c.bf16 %v304, %v303
    %v306 = vld [vmem:[#allocation6] sm:$0xf]
    %v307 = vld [vmem:[#allocation6 + $0x4] sm:$0xf]
    %v308 = vld [vmem:[#allocation6 + $0x8] sm:$0xf]
    %v309 = vld [vmem:[#allocation6 + $0xc] sm:$0xf]
    %v310 = vld [vmem:[#allocation6 + $0x10] sm:$0xf]
    %v311 = vld [vmem:[#allocation6 + $0x14] sm:$0xf]
    %v312 = vld [vmem:[#allocation6 + $0x18] sm:$0xf]
    %v313 = vld [vmem:[#allocation6 + $0x1c] sm:$0xf]
    %v314 = vld [vmem:[#allocation6 + $0x20] sm:$0xf]
    %v315 = vld [vmem:[#allocation6 + $0x24] sm:$0xf]
    %v316 = vld [vmem:[#allocation6 + $0x28] sm:$0xf]
    %v317 = vld [vmem:[#allocation6 + $0x2c] sm:$0xf]
    %v318 = vld [vmem:[#allocation6 + $0x30] sm:$0xf]
    %v319 = vld [vmem:[#allocation6 + $0x34] sm:$0xf]
    %v320 = vld [vmem:[#allocation6 + $0x38] sm:$0xf]
    %v321 = vld [vmem:[#allocation6 + $0x3c] sm:$0xf]
    %v322 = vld [vmem:[%s6] sm:$0x1]
    %v324 = vlaneseq
    %v325 = vshrl.u32 %v324, 7
    %v326 = vsub.s32 0, %v325
    %v327 = vrot.slane %v322, %v326
    %v345 = vunpack.c.l.b16 %v306
    %v346 = vunpack.c.l.b16 %v307
    %v347 = vunpack.c.l.b16 %v308
    %v348 = vunpack.c.l.b16 %v309
    %v349 = vunpack.c.l.b16 %v310
    %v350 = vunpack.c.l.b16 %v311
    %v351 = vunpack.c.l.b16 %v312
    %v352 = vunpack.c.l.b16 %v313
    %v353 = vunpack.c.l.b16 %v314
    %v354 = vunpack.c.l.b16 %v315
    %v355 = vunpack.c.l.b16 %v316
    %v356 = vunpack.c.l.b16 %v317
    %v357 = vunpack.c.l.b16 %v318
    %v358 = vunpack.c.l.b16 %v319
    %v359 = vunpack.c.l.b16 %v320
    %v360 = vunpack.c.l.b16 %v321
    %v361 = vpack.c.b16 %v346, %v345
    %v362 = vpack.c.b16 %v348, %v347
    %v363 = vpack.c.b16 %v350, %v349
    %v364 = vpack.c.b16 %v352, %v351
    %v365 = vpack.c.b16 %v354, %v353
    %v366 = vpack.c.b16 %v356, %v355
    %v367 = vpack.c.b16 %v358, %v357
    %v368 = vpack.c.b16 %v360, %v359
    %377 = vmatprep.subr.bf16.mxu0 0
    %378 = vmatpush1.bf16.msra.mxu0 %v368
    %379 = vmatprep.subr.bf16.mxu0 0
    %380 = vmatpush1.bf16.msra.mxu0 %v367
    %381 = vmatprep.subr.bf16.mxu0 0
    %382 = vmatpush1.bf16.msra.mxu0 %v366
    %383 = vmatprep.subr.bf16.mxu0 0
    %384 = vmatpush1.bf16.msra.mxu0 %v365
    %385 = vmatprep.subr.bf16.mxu0 0
    %386 = vmatpush1.bf16.msra.mxu0 %v364
    %387 = vmatprep.subr.bf16.mxu0 0
    %388 = vmatpush1.bf16.msra.mxu0 %v363
    %389 = vmatprep.subr.bf16.mxu0 0
    %390 = vmatpush1.bf16.msra.mxu0 %v362
    %391 = vmatprep.subr.bf16.mxu0 0
    %392 = vmatpush1.bf16.msra.mxu0 %v361
    %393 = vmatprep.subr.bf16.mxu0 0
    %394 = vmatpush2.bf16.msra.mxu0 0
    %395 = vmatprep.subr.bf16.mxu0 0
    %396 = vmatpush2.bf16.msra.mxu0 0
    %397 = vmatprep.subr.bf16.mxu0 0
    %398 = vmatpush2.bf16.msra.mxu0 0
    %399 = vmatprep.subr.bf16.mxu0 0
    %400 = vmatpush2.bf16.msra.mxu0 0
    %401 = vmatprep.subr.bf16.mxu0 0
    %402 = vmatpush2.bf16.msra.mxu0 0
    %403 = vmatprep.subr.bf16.mxu0 0
    %404 = vmatpush2.bf16.msra.mxu0 0
    %405 = vmatprep.subr.bf16.mxu0 0
    %406 = vmatpush2.bf16.msra.mxu0 0
    %407 = vmatprep.subr.bf16.mxu0 0
    %408 = vmatpush2.bf16.msra.mxu0 0
    %409 = vmatprep.mubr.bf16.mxu0 0
    %410 = vmatmul.mubr.bf16.gmra.mxu0 %v305
    %v411 = vpop.f32.mrf.mxu0
    %v412 = vadd.f32 %v327, %v411
    %v413 = vpop.f32.mrf.mxu0
    %v414 = vpop.f32.mrf.mxu0
    %v415 = vadd.f32 %v327, %v414
    %v416 = vpop.f32.mrf.mxu0
    %417 = vdwg.mxu0
    %v418 = vpack.c.bf16 %v415, %v412
    %v420 = vunpack.c.l.b16 %v418
    %v421 = vunpack.c.h.b16 %v418
    %v422 = vpack.c.b16 %v420, %v420
    %v423 = vpack.c.b16 %v421, %v421
    %426 = vst [vmem:[%s7] sm:$0xf] %v422
    %427 = vst [vmem:[%s7 + $0x4] sm:$0xf] %v423
    // Predicated region
    $region42: #{mlp_forward.1} parent=1 // pred_check
      _
    $region43: #{mlp_forward.1} parent=1 // pred_check_branch
      %429 = sbr.rel (0) target = $region45
    $region44: #{mlp_forward.1} parent=1 // pred_region
      _
    $region45: #{mlp_forward.1} parent=1 // pred_fallthru
      _
    // Predicated region
    $region46: #{mlp_forward.1} parent=1 // pred_check
      _
    $region47: #{mlp_forward.1} parent=1 // pred_check_branch
      %431 = sbr.rel (0) target = $region49
    $region48: #{mlp_forward.1} parent=1 // pred_region
      _
    $region49: #{mlp_forward.1} parent=1 // pred_fallthru
      _
    %432 = vsyncpa [#allocation3], 1
    %433 = vsyncpa [#allocation5], 1

</llo_original>
